<compile_context>
chip_gen: v7x
topology: tpu7x:2x2x1
jax: 0.10.0
libtpu: 0.0.40
codegen_flags: <defaults>
</compile_context>

<pallas_src>
import functools

import jax
import jax.numpy as jnp
import numpy as np
from jax.experimental import pallas as pl
from jax.experimental.pallas import tpu as pltpu


def _shift_lanes(v, shift):
    """s[:, i] = v[:, i + shift] for in-range i+shift, zero-filled at the ends."""
    n = v.shape[-1]
    if shift == 0:
        return v
    zeros = jnp.zeros((v.shape[0], abs(shift)), v.dtype)
    if shift > 0:
        return jnp.concatenate([v[:, shift:], zeros], axis=-1)
    return jnp.concatenate([zeros, v[:, : n + shift]], axis=-1)


def bottleneck_kernel(x_ref, w1_ref, b1_ref, w2_ref, b2_ref, w3_ref, b3_ref,
                      mask_ref, o_ref, patch_ref, *, width):
    """One batch element. Activations live as (C, H*W): C on sublanes, HW on lanes."""
    x = x_ref[0]                                   # (Cin, HW) f32 (residual kept in f32)
    P = w1_ref.shape[0]

    # ---- conv1 (1x1, BN-folded) + ReLU : bf16 MXU, f32 accumulate ----
    h = jnp.dot(w1_ref[...], x.astype(jnp.bfloat16),
                preferred_element_type=jnp.float32)        # (P, HW)
    h = jnp.maximum(h + b1_ref[...], 0.0)

    # ---- conv2 (3x3, stride 1, pad 1, BN-folded) + ReLU ----
    # masked lane-shift im2col into VMEM scratch, then one fat matmul (K = 9P).
    # Scratch rows are fully overwritten every step -> no zeroing needed.
    k = 0
    for dy in (-1, 0, 1):
        for dx in (-1, 0, 1):
            shift = dy * width + dx
            piece = _shift_lanes(h, shift)                  # (P, HW) f32
            patch_ref[k * P:(k + 1) * P, :] = piece * mask_ref[k:k + 1, :]
            k += 1
    patch = patch_ref[...].astype(jnp.bfloat16)             # (9P, HW)
    h2 = jnp.dot(w2_ref[...], patch,
                 preferred_element_type=jnp.float32)        # (P, HW)
    h2 = jnp.maximum(h2 + b2_ref[...], 0.0)

    # ---- conv3 (1x1, BN-folded) + identity residual + ReLU ----
    h3 = jnp.dot(w3_ref[...], h2.astype(jnp.bfloat16),
                 preferred_element_type=jnp.float32)        # (Cout, HW)
    out = jnp.maximum(h3 + b3_ref[...] + x, 0.0)
    o_ref[0] = out.astype(o_ref.dtype)                      # lane-dense (Cout, 256) store


def residual_bottleneck(x, w1s, b1, w2s, b2, w3s, b3):
    """x: (N, Cin, H, W) float32 (NCHW, as the PyTorch module).

    wNs: conv weights in PyTorch OIHW layout with the BN scale already folded in
         (bf16).  bN: folded BN biases (beta - mean*scale), float32, shape (C,).
    """
    N, Cin, H, W = x.shape
    P = w1s.shape[0]
    Cout = w3s.shape[0]
    assert Cout == Cin, "identity residual requires inplanes == planes * expansion"
    HW = H * W
    assert HW % 128 == 0, "flattened spatial dim must be lane-aligned"

    # Channels-on-sublanes / flattened-spatial-on-lanes: a free reshape of NCHW.
    x_flat = x.reshape(N, Cin, HW)

    # Kernel-side weight layouts (pure host-side rearrangements of bf16 values).
    w1k = w1s.reshape(P, Cin)                                       # (P, Cin)
    w2k = jnp.transpose(w2s, (0, 2, 3, 1)).reshape(P, 9 * P)        # (P, 9P), k = ky*3+kx
    w3k = w3s.reshape(Cout, P)                                      # (Cout, P)
    b1k = b1.reshape(P, 1)
    b2k = b2.reshape(P, 1)
    b3k = b3.reshape(Cout, 1)

    # Host-precomputed border-validity masks for the 9 taps (zero padding).
    yy, xx = np.meshgrid(np.arange(H), np.arange(W), indexing="ij")
    rows = []
    for dy in (-1, 0, 1):
        for dx in (-1, 0, 1):
            valid = ((yy + dy >= 0) & (yy + dy < H) &
                     (xx + dx >= 0) & (xx + dx < W))
            rows.append(valid.reshape(-1))
    mask = jnp.asarray(np.stack(rows), dtype=jnp.float32)           # (9, HW)

    kernel = functools.partial(bottleneck_kernel, width=W)

    out_flat = pl.pallas_call(
        kernel,
        out_shape=jax.ShapeDtypeStruct((N, Cout, HW), x.dtype),
        grid_spec=pltpu.PrefetchScalarGridSpec(
            num_scalar_prefetch=0,
            grid=(N,),
            in_specs=[
                pl.BlockSpec((1, Cin, HW), lambda n: (n, 0, 0)),
                pl.BlockSpec((P, Cin), lambda n: (0, 0)),
                pl.BlockSpec((P, 1), lambda n: (0, 0)),
                pl.BlockSpec((P, 9 * P), lambda n: (0, 0)),
                pl.BlockSpec((P, 1), lambda n: (0, 0)),
                pl.BlockSpec((Cout, P), lambda n: (0, 0)),
                pl.BlockSpec((Cout, 1), lambda n: (0, 0)),
                pl.BlockSpec((9, HW), lambda n: (0, 0)),
            ],
            out_specs=pl.BlockSpec((1, Cout, HW), lambda n: (n, 0, 0)),
            scratch_shapes=[pltpu.VMEM((9 * P, HW), jnp.float32)],
        ),
        compiler_params=pltpu.CompilerParams(
            dimension_semantics=("parallel",),
            vmem_limit_bytes=32 * 1024 * 1024),
    )(x_flat, w1k, b1k, w2k, b2k, w3k, b3k, mask)

    return out_flat.reshape(N, Cout, H, W)


def reference_forward(x, w1s, b1, w2s, b2, w3s, b3):
    """Pure-JAX NCHW reference with the same BN fold and bf16 matmul operands."""
    dn = ("NCHW", "OIHW", "NCHW")

    def conv(inp, w, pad):
        return jax.lax.conv_general_dilated(
            inp.astype(jnp.bfloat16), w, (1, 1), pad,
            dimension_numbers=dn, preferred_element_type=jnp.float32)

    h = jnp.maximum(conv(x, w1s, "VALID") + b1[None, :, None, None], 0.0)
    h = jnp.maximum(conv(h, w2s, [(1, 1), (1, 1)]) + b2[None, :, None, None], 0.0)
    h = conv(h, w3s, "VALID") + b3[None, :, None, None]
    return jnp.maximum(h + x, 0.0)


if __name__ == "__main__":
    # Small shapes consistent with the module: inplanes=8, planes=4, expansion=2
    # so the identity residual (downsample=None, stride=1) is valid.
    N, H, W = 2, 16, 16
    inplanes, planes, expansion = 8, 4, 2
    Cout = planes * expansion
    eps = 1e-5

    key = jax.random.PRNGKey(0)
    ks = jax.random.split(key, 16)

    x = jax.random.normal(ks[0], (N, inplanes, H, W), jnp.float32)   # NCHW like PyTorch

    # Conv weights in PyTorch OIHW layout.
    w1 = 0.2 * jax.random.normal(ks[1], (planes, inplanes, 1, 1), jnp.float32)
    w2 = 0.2 * jax.random.normal(ks[2], (planes, planes, 3, 3), jnp.float32)
    w3 = 0.2 * jax.random.normal(ks[3], (Cout, planes, 1, 1), jnp.float32)

    def bn_params(kg, kb, km, kv, c):
        gamma = jax.random.uniform(kg, (c,), jnp.float32, 0.5, 1.5)
        beta = 0.1 * jax.random.normal(kb, (c,), jnp.float32)
        rmean = 0.1 * jax.random.normal(km, (c,), jnp.float32)
        rvar = jax.random.uniform(kv, (c,), jnp.float32, 0.5, 1.5)
        scale = gamma / jnp.sqrt(rvar + eps)
        bias = beta - rmean * scale
        return scale, bias

    s1, b1 = bn_params(ks[4], ks[5], ks[6], ks[7], planes)
    s2, b2 = bn_params(ks[8], ks[9], ks[10], ks[11], planes)
    s3, b3 = bn_params(ks[12], ks[13], ks[14], ks[15], Cout)

    # Fold BN scales into the conv weights (one-time host precompute), bf16 for the MXU.
    w1s = (w1 * s1[:, None, None, None]).astype(jnp.bfloat16)
    w2s = (w2 * s2[:, None, None, None]).astype(jnp.bfloat16)
    w3s = (w3 * s3[:, None, None, None]).astype(jnp.bfloat16)

    out = residual_bottleneck(x, w1s, b1, w2s, b2, w3s, b3)
    out = jax.block_until_ready(out)

    ref = jax.block_until_ready(reference_forward(x, w1s, b1, w2s, b2, w3s, b3))

    np.testing.assert_allclose(np.asarray(out), np.asarray(ref),
                               rtol=1e-2, atol=1e-2)
    print("KERNEL_OK")
</pallas_src>

<mosaic_0001>
module attributes {stable_mosaic.version = 11 : i64} {
  func.func @bottleneck_kernel(%arg0: i32, %arg1: memref<1x8x256xf32, #tpu.memory_space<vmem>>, %arg2: memref<4x8xbf16, #tpu.memory_space<vmem>>, %arg3: memref<4x1xf32, #tpu.memory_space<vmem>>, %arg4: memref<4x36xbf16, #tpu.memory_space<vmem>>, %arg5: memref<4x1xf32, #tpu.memory_space<vmem>>, %arg6: memref<8x4xbf16, #tpu.memory_space<vmem>>, %arg7: memref<8x1xf32, #tpu.memory_space<vmem>>, %arg8: memref<9x256xf32, #tpu.memory_space<vmem>>, %arg9: memref<1x8x256xf32, #tpu.memory_space<vmem>>, %arg10: memref<36x256xf32, #tpu.memory_space<vmem>>) attributes {dimension_semantics = [#tpu.dimension_semantics<parallel>], iteration_bounds = array<i64: 2>, scalar_prefetch = 0 : i64, scratch_operands = 1 : i64, tpu.core_type = #tpu.core_type<tc>, window_params = [{transform_indices = @transform_0, window_bounds = array<i64: 1, 8, 256>}, {pipeline_mode = #tpu.pipeline_mode<synchronous>, transform_indices = @transform_1, window_bounds = array<i64: 4, 8>}, {pipeline_mode = #tpu.pipeline_mode<synchronous>, transform_indices = @transform_2, window_bounds = array<i64: 4, 1>}, {pipeline_mode = #tpu.pipeline_mode<synchronous>, transform_indices = @transform_3, window_bounds = array<i64: 4, 36>}, {pipeline_mode = #tpu.pipeline_mode<synchronous>, transform_indices = @transform_4, window_bounds = array<i64: 4, 1>}, {pipeline_mode = #tpu.pipeline_mode<synchronous>, transform_indices = @transform_5, window_bounds = array<i64: 8, 4>}, {pipeline_mode = #tpu.pipeline_mode<synchronous>, transform_indices = @transform_6, window_bounds = array<i64: 8, 1>}, {pipeline_mode = #tpu.pipeline_mode<synchronous>, transform_indices = @transform_7, window_bounds = array<i64: 9, 256>}, {transform_indices = @transform_8, window_bounds = array<i64: 1, 8, 256>}]} {
    %c0 = arith.constant 0 : index
    %c0_0 = arith.constant 0 : index
    %c0_1 = arith.constant 0 : index
    %0 = vector.load %arg1[%c0, %c0_0, %c0_1] : memref<1x8x256xf32, #tpu.memory_space<vmem>>, vector<1x8x256xf32>
    %1 = vector.shape_cast %0 : vector<1x8x256xf32> to vector<8x256xf32>
    %c0_2 = arith.constant 0 : index
    %c0_3 = arith.constant 0 : index
    %2 = vector.load %arg2[%c0_2, %c0_3] : memref<4x8xbf16, #tpu.memory_space<vmem>>, vector<4x8xbf16>
    %3 = arith.truncf %1 : vector<8x256xf32> to vector<8x256xbf16>
    %cst = arith.constant dense<0.000000e+00> : vector<4x256xf32>
    %4 = tpu.matmul %2, %3, %cst {dimension_numbers = #tpu.dot_dimension_numbers<[1], [0], [0], [1], [0, 0, 1, 1], [], []>} : vector<4x8xbf16>, vector<8x256xbf16>, vector<4x256xf32> -> vector<4x256xf32>
    %c0_4 = arith.constant 0 : index
    %c0_5 = arith.constant 0 : index
    %5 = vector.load %arg3[%c0_4, %c0_5] : memref<4x1xf32, #tpu.memory_space<vmem>>, vector<4x1xf32>
    %6 = vector.broadcast %5 : vector<4x1xf32> to vector<4x256xf32>
    %7 = arith.addf %4, %6 : vector<4x256xf32>
    %cst_6 = arith.constant 0.000000e+00 : f32
    %8 = vector.broadcast %cst_6 : f32 to vector<4x256xf32>
    %9 = arith.maximumf %7, %8 : vector<4x256xf32>
    %cst_7 = arith.constant 0.000000e+00 : f32
    %10 = vector.broadcast %cst_7 : f32 to vector<4x17xf32>
    %11 = vector.extract_strided_slice %9 {offsets = [0, 0], sizes = [4, 239], strides = [1, 1]} : vector<4x256xf32> to vector<4x239xf32>
    %12 = tpu.concatenate %10, %11 in 1 : vector<4x17xf32>, vector<4x239xf32> -> vector<4x256xf32>
    %c0_8 = arith.constant 0 : index
    %c0_9 = arith.constant 0 : index
    %13 = vector.load %arg8[%c0_8, %c0_9] : memref<9x256xf32, #tpu.memory_space<vmem>>, vector<1x256xf32>
    %14 = vector.broadcast %13 : vector<1x256xf32> to vector<4x256xf32>
    %15 = arith.mulf %12, %14 : vector<4x256xf32>
    %c0_10 = arith.constant 0 : index
    %c0_11 = arith.constant 0 : index
    %16 = vector.load %arg10[%c0_10, %c0_11] : memref<36x256xf32, #tpu.memory_space<vmem>>, vector<4x256xf32>
    tpu.vector_store %arg10[%c0_10, %c0_11], %15 {strides = array<i32>} : memref<36x256xf32, #tpu.memory_space<vmem>>, vector<4x256xf32>,
    %cst_12 = arith.constant 0.000000e+00 : f32
    %17 = vector.broadcast %cst_12 : f32 to vector<4x16xf32>
    %18 = vector.extract_strided_slice %9 {offsets = [0, 0], sizes = [4, 240], strides = [1, 1]} : vector<4x256xf32> to vector<4x240xf32>
    %19 = tpu.concatenate %17, %18 in 1 : vector<4x16xf32>, vector<4x240xf32> -> vector<4x256xf32>
    %c1 = arith.constant 1 : index
    %c0_13 = arith.constant 0 : index
    %20 = vector.load %arg8[%c1, %c0_13] : memref<9x256xf32, #tpu.memory_space<vmem>>, vector<1x256xf32>
    %21 = vector.broadcast %20 : vector<1x256xf32> to vector<4x256xf32>
    %22 = arith.mulf %19, %21 : vector<4x256xf32>
    %c4 = arith.constant 4 : index
    %c0_14 = arith.constant 0 : index
    %23 = vector.load %arg10[%c4, %c0_14] : memref<36x256xf32, #tpu.memory_space<vmem>>, vector<4x256xf32>
    tpu.vector_store %arg10[%c4, %c0_14], %22 {strides = array<i32>} : memref<36x256xf32, #tpu.memory_space<vmem>>, vector<4x256xf32>,
    %cst_15 = arith.constant 0.000000e+00 : f32
    %24 = vector.broadcast %cst_15 : f32 to vector<4x15xf32>
    %25 = vector.extract_strided_slice %9 {offsets = [0, 0], sizes = [4, 241], strides = [1, 1]} : vector<4x256xf32> to vector<4x241xf32>
    %26 = tpu.concatenate %24, %25 in 1 : vector<4x15xf32>, vector<4x241xf32> -> vector<4x256xf32>
    %c2 = arith.constant 2 : index
    %c0_16 = arith.constant 0 : index
    %27 = vector.load %arg8[%c2, %c0_16] : memref<9x256xf32, #tpu.memory_space<vmem>>, vector<1x256xf32>
    %28 = vector.broadcast %27 : vector<1x256xf32> to vector<4x256xf32>
    %29 = arith.mulf %26, %28 : vector<4x256xf32>
    %c8 = arith.constant 8 : index
    %c0_17 = arith.constant 0 : index
    %30 = vector.load %arg10[%c8, %c0_17] : memref<36x256xf32, #tpu.memory_space<vmem>>, vector<4x256xf32>
    tpu.vector_store %arg10[%c8, %c0_17], %29 {strides = array<i32>} : memref<36x256xf32, #tpu.memory_space<vmem>>, vector<4x256xf32>,
    %cst_18 = arith.constant 0.000000e+00 : f32
    %31 = vector.broadcast %cst_18 : f32 to vector<4x1xf32>
    %32 = vector.extract_strided_slice %9 {offsets = [0, 0], sizes = [4, 255], strides = [1, 1]} : vector<4x256xf32> to vector<4x255xf32>
    %33 = tpu.concatenate %31, %32 in 1 : vector<4x1xf32>, vector<4x255xf32> -> vector<4x256xf32>
    %c3 = arith.constant 3 : index
    %c0_19 = arith.constant 0 : index
    %34 = vector.load %arg8[%c3, %c0_19] : memref<9x256xf32, #tpu.memory_space<vmem>>, vector<1x256xf32>
    %35 = vector.broadcast %34 : vector<1x256xf32> to vector<4x256xf32>
    %36 = arith.mulf %33, %35 : vector<4x256xf32>
    %c12 = arith.constant 12 : index
    %c0_20 = arith.constant 0 : index
    %37 = vector.load %arg10[%c12, %c0_20] : memref<36x256xf32, #tpu.memory_space<vmem>>, vector<4x256xf32>
    tpu.vector_store %arg10[%c12, %c0_20], %36 {strides = array<i32>} : memref<36x256xf32, #tpu.memory_space<vmem>>, vector<4x256xf32>,
    %c4_21 = arith.constant 4 : index
    %c0_22 = arith.constant 0 : index
    %38 = vector.load %arg8[%c4_21, %c0_22] : memref<9x256xf32, #tpu.memory_space<vmem>>, vector<1x256xf32>
    %39 = vector.broadcast %38 : vector<1x256xf32> to vector<4x256xf32>
    %40 = arith.mulf %9, %39 : vector<4x256xf32>
    %c16 = arith.constant 16 : index
    %c0_23 = arith.constant 0 : index
    %41 = vector.load %arg10[%c16, %c0_23] : memref<36x256xf32, #tpu.memory_space<vmem>>, vector<4x256xf32>
    tpu.vector_store %arg10[%c16, %c0_23], %40 {strides = array<i32>} : memref<36x256xf32, #tpu.memory_space<vmem>>, vector<4x256xf32>,
    %cst_24 = arith.constant 0.000000e+00 : f32
    %42 = vector.broadcast %cst_24 : f32 to vector<4x1xf32>
    %43 = vector.extract_strided_slice %9 {offsets = [0, 1], sizes = [4, 255], strides = [1, 1]} : vector<4x256xf32> to vector<4x255xf32>
    %44 = tpu.concatenate %43, %42 in 1 : vector<4x255xf32>, vector<4x1xf32> -> vector<4x256xf32>
    %c5 = arith.constant 5 : index
    %c0_25 = arith.constant 0 : index
    %45 = vector.load %arg8[%c5, %c0_25] : memref<9x256xf32, #tpu.memory_space<vmem>>, vector<1x256xf32>
    %46 = vector.broadcast %45 : vector<1x256xf32> to vector<4x256xf32>
    %47 = arith.mulf %44, %46 : vector<4x256xf32>
    %c20 = arith.constant 20 : index
    %c0_26 = arith.constant 0 : index
    %48 = vector.load %arg10[%c20, %c0_26] : memref<36x256xf32, #tpu.memory_space<vmem>>, vector<4x256xf32>
    tpu.vector_store %arg10[%c20, %c0_26], %47 {strides = array<i32>} : memref<36x256xf32, #tpu.memory_space<vmem>>, vector<4x256xf32>,
    %cst_27 = arith.constant 0.000000e+00 : f32
    %49 = vector.broadcast %cst_27 : f32 to vector<4x15xf32>
    %50 = vector.extract_strided_slice %9 {offsets = [0, 15], sizes = [4, 241], strides = [1, 1]} : vector<4x256xf32> to vector<4x241xf32>
    %51 = tpu.concatenate %50, %49 in 1 : vector<4x241xf32>, vector<4x15xf32> -> vector<4x256xf32>
    %c6 = arith.constant 6 : index
    %c0_28 = arith.constant 0 : index
    %52 = vector.load %arg8[%c6, %c0_28] : memref<9x256xf32, #tpu.memory_space<vmem>>, vector<1x256xf32>
    %53 = vector.broadcast %52 : vector<1x256xf32> to vector<4x256xf32>
    %54 = arith.mulf %51, %53 : vector<4x256xf32>
    %c24 = arith.constant 24 : index
    %c0_29 = arith.constant 0 : index
    %55 = vector.load %arg10[%c24, %c0_29] : memref<36x256xf32, #tpu.memory_space<vmem>>, vector<4x256xf32>
    tpu.vector_store %arg10[%c24, %c0_29], %54 {strides = array<i32>} : memref<36x256xf32, #tpu.memory_space<vmem>>, vector<4x256xf32>,
    %cst_30 = arith.constant 0.000000e+00 : f32
    %56 = vector.broadcast %cst_30 : f32 to vector<4x16xf32>
    %57 = vector.extract_strided_slice %9 {offsets = [0, 16], sizes = [4, 240], strides = [1, 1]} : vector<4x256xf32> to vector<4x240xf32>
    %58 = tpu.concatenate %57, %56 in 1 : vector<4x240xf32>, vector<4x16xf32> -> vector<4x256xf32>
    %c7 = arith.constant 7 : index
    %c0_31 = arith.constant 0 : index
    %59 = vector.load %arg8[%c7, %c0_31] : memref<9x256xf32, #tpu.memory_space<vmem>>, vector<1x256xf32>
    %60 = vector.broadcast %59 : vector<1x256xf32> to vector<4x256xf32>
    %61 = arith.mulf %58, %60 : vector<4x256xf32>
    %c28 = arith.constant 28 : index
    %c0_32 = arith.constant 0 : index
    %62 = vector.load %arg10[%c28, %c0_32] : memref<36x256xf32, #tpu.memory_space<vmem>>, vector<4x256xf32>
    tpu.vector_store %arg10[%c28, %c0_32], %61 {strides = array<i32>} : memref<36x256xf32, #tpu.memory_space<vmem>>, vector<4x256xf32>,
    %cst_33 = arith.constant 0.000000e+00 : f32
    %63 = vector.broadcast %cst_33 : f32 to vector<4x17xf32>
    %64 = vector.extract_strided_slice %9 {offsets = [0, 17], sizes = [4, 239], strides = [1, 1]} : vector<4x256xf32> to vector<4x239xf32>
    %65 = tpu.concatenate %64, %63 in 1 : vector<4x239xf32>, vector<4x17xf32> -> vector<4x256xf32>
    %c8_34 = arith.constant 8 : index
    %c0_35 = arith.constant 0 : index
    %66 = vector.load %arg8[%c8_34, %c0_35] : memref<9x256xf32, #tpu.memory_space<vmem>>, vector<1x256xf32>
    %67 = vector.broadcast %66 : vector<1x256xf32> to vector<4x256xf32>
    %68 = arith.mulf %65, %67 : vector<4x256xf32>
    %c32 = arith.constant 32 : index
    %c0_36 = arith.constant 0 : index
    %69 = vector.load %arg10[%c32, %c0_36] : memref<36x256xf32, #tpu.memory_space<vmem>>, vector<4x256xf32>
    tpu.vector_store %arg10[%c32, %c0_36], %68 {strides = array<i32>} : memref<36x256xf32, #tpu.memory_space<vmem>>, vector<4x256xf32>,
    %c0_37 = arith.constant 0 : index
    %c0_38 = arith.constant 0 : index
    %70 = vector.load %arg10[%c0_37, %c0_38] : memref<36x256xf32, #tpu.memory_space<vmem>>, vector<36x256xf32>
    %71 = arith.truncf %70 : vector<36x256xf32> to vector<36x256xbf16>
    %c0_39 = arith.constant 0 : index
    %c0_40 = arith.constant 0 : index
    %72 = vector.load %arg4[%c0_39, %c0_40] : memref<4x36xbf16, #tpu.memory_space<vmem>>, vector<4x36xbf16>
    %cst_41 = arith.constant dense<0.000000e+00> : vector<4x256xf32>
    %73 = tpu.matmul %72, %71, %cst_41 {dimension_numbers = #tpu.dot_dimension_numbers<[1], [0], [0], [1], [0, 0, 1, 1], [], []>} : vector<4x36xbf16>, vector<36x256xbf16>, vector<4x256xf32> -> vector<4x256xf32>
    %c0_42 = arith.constant 0 : index
    %c0_43 = arith.constant 0 : index
    %74 = vector.load %arg5[%c0_42, %c0_43] : memref<4x1xf32, #tpu.memory_space<vmem>>, vector<4x1xf32>
    %75 = vector.broadcast %74 : vector<4x1xf32> to vector<4x256xf32>
    %76 = arith.addf %73, %75 : vector<4x256xf32>
    %cst_44 = arith.constant 0.000000e+00 : f32
    %77 = vector.broadcast %cst_44 : f32 to vector<4x256xf32>
    %78 = arith.maximumf %76, %77 : vector<4x256xf32>
    %c0_45 = arith.constant 0 : index
    %c0_46 = arith.constant 0 : index
    %79 = vector.load %arg6[%c0_45, %c0_46] : memref<8x4xbf16, #tpu.memory_space<vmem>>, vector<8x4xbf16>
    %80 = arith.truncf %78 : vector<4x256xf32> to vector<4x256xbf16>
    %cst_47 = arith.constant dense<0.000000e+00> : vector<8x256xf32>
    %81 = tpu.matmul %79, %80, %cst_47 {dimension_numbers = #tpu.dot_dimension_numbers<[1], [0], [0], [1], [0, 0, 1, 1], [], []>} : vector<8x4xbf16>, vector<4x256xbf16>, vector<8x256xf32> -> vector<8x256xf32>
    %c0_48 = arith.constant 0 : index
    %c0_49 = arith.constant 0 : index
    %82 = vector.load %arg7[%c0_48, %c0_49] : memref<8x1xf32, #tpu.memory_space<vmem>>, vector<8x1xf32>
    %83 = vector.broadcast %82 : vector<8x1xf32> to vector<8x256xf32>
    %84 = arith.addf %81, %83 : vector<8x256xf32>
    %85 = arith.addf %84, %1 : vector<8x256xf32>
    %cst_50 = arith.constant 0.000000e+00 : f32
    %86 = vector.broadcast %cst_50 : f32 to vector<8x256xf32>
    %87 = arith.maximumf %85, %86 : vector<8x256xf32>
    %c0_51 = arith.constant 0 : index
    %c0_52 = arith.constant 0 : index
    %c0_53 = arith.constant 0 : index
    %88 = vector.load %arg9[%c0_51, %c0_52, %c0_53] : memref<1x8x256xf32, #tpu.memory_space<vmem>>, vector<1x8x256xf32>
    %89 = vector.shape_cast %88 : vector<1x8x256xf32> to vector<8x256xf32>
    %90 = vector.shape_cast %87 : vector<8x256xf32> to vector<1x8x256xf32>
    tpu.vector_store %arg9[%c0_51, %c0_52, %c0_53], %90 {strides = array<i32>} : memref<1x8x256xf32, #tpu.memory_space<vmem>>, vector<1x8x256xf32>,
    return
  }
  func.func @transform_0(%arg0: i32) -> (i32, i32, i32) {
    %c0_i32 = arith.constant 0 : i32
    %c0_i32_0 = arith.constant 0 : i32
    %c0_i32_1 = arith.constant 0 : i32
    return %arg0, %c0_i32, %c0_i32_0 : i32, i32, i32
  }
  func.func @transform_1(%arg0: i32) -> (i32, i32) {
    %c0_i32 = arith.constant 0 : i32
    %c0_i32_0 = arith.constant 0 : i32
    %c0_i32_1 = arith.constant 0 : i32
    return %c0_i32, %c0_i32_0 : i32, i32
  }
  func.func @transform_2(%arg0: i32) -> (i32, i32) {
    %c0_i32 = arith.constant 0 : i32
    %c0_i32_0 = arith.constant 0 : i32
    %c0_i32_1 = arith.constant 0 : i32
    return %c0_i32, %c0_i32_0 : i32, i32
  }
  func.func @transform_3(%arg0: i32) -> (i32, i32) {
    %c0_i32 = arith.constant 0 : i32
    %c0_i32_0 = arith.constant 0 : i32
    %c0_i32_1 = arith.constant 0 : i32
    return %c0_i32, %c0_i32_0 : i32, i32
  }
  func.func @transform_4(%arg0: i32) -> (i32, i32) {
    %c0_i32 = arith.constant 0 : i32
    %c0_i32_0 = arith.constant 0 : i32
    %c0_i32_1 = arith.constant 0 : i32
    return %c0_i32, %c0_i32_0 : i32, i32
  }
  func.func @transform_5(%arg0: i32) -> (i32, i32) {
    %c0_i32 = arith.constant 0 : i32
    %c0_i32_0 = arith.constant 0 : i32
    %c0_i32_1 = arith.constant 0 : i32
    return %c0_i32, %c0_i32_0 : i32, i32
  }
  func.func @transform_6(%arg0: i32) -> (i32, i32) {
    %c0_i32 = arith.constant 0 : i32
    %c0_i32_0 = arith.constant 0 : i32
    %c0_i32_1 = arith.constant 0 : i32
    return %c0_i32, %c0_i32_0 : i32, i32
  }
  func.func @transform_7(%arg0: i32) -> (i32, i32) {
    %c0_i32 = arith.constant 0 : i32
    %c0_i32_0 = arith.constant 0 : i32
    %c0_i32_1 = arith.constant 0 : i32
    return %c0_i32, %c0_i32_0 : i32, i32
  }
  func.func @transform_8(%arg0: i32) -> (i32, i32, i32) {
    %c0_i32 = arith.constant 0 : i32
    %c0_i32_0 = arith.constant 0 : i32
    %c0_i32_1 = arith.constant 0 : i32
    return %arg0, %c0_i32, %c0_i32_0 : i32, i32, i32
  }
}

</mosaic_0001>

<llo_original>
// kernel: tpu_custom_call.1
$region0: #{tpu_custom_call.1}
  #allocation0 [shape = 'u32[]', space=smem, size = 0x4, offset = 0x4, fixed_abs, tag = 'smem constant byte address 0x4 - core index']
  #allocation1 [shape = 'u32[144,128]{1,0:T(1,128)}', space=vmem, size = 0x12000, scoped, tag = 'internal scratch']
  #allocation2 [shape = 'f32[36,256]{1,0:T(8,128)}', space=vmem, size = 0xa000, scoped, tag = 'scratch operand']
  %s0 = inlined_call_operand.hbm [shape: f32[2,8,256], index: 0, kind: input, shape index: {}]
  %s1 = inlined_call_operand.vmem [shape: bf16[4,8], index: 1, kind: input, shape index: {}]
  %s2 = inlined_call_operand.vmem [shape: f32[4,1], index: 2, kind: input, shape index: {}]
  %s3 = inlined_call_operand.vmem [shape: bf16[4,36], index: 3, kind: input, shape index: {}]
  %s4 = inlined_call_operand.vmem [shape: f32[4,1], index: 4, kind: input, shape index: {}]
  %s5 = inlined_call_operand.vmem [shape: bf16[8,4], index: 5, kind: input, shape index: {}]
  %s6 = inlined_call_operand.vmem [shape: f32[8,1], index: 6, kind: input, shape index: {}]
  %s7 = inlined_call_operand.vmem [shape: f32[9,256], index: 7, kind: input, shape index: {}]
  %s8 = inlined_call_operand.hbm [shape: f32[2,8,256], index: 8, kind: output, shape index: {}]
  %s9 = sld [smem:[#allocation0]]
  $region69: #{tpu_custom_call.1} parent=0
    _
  %s11 = ssub.s32 1, %s9
  %s12 = scalar_select 0, %s11, %s9
  $region1: #{tpu_custom_call.1} parent=0
    #allocation3 [shape = 'u8[16384]{0}', space=vmem, size = 0x4000, scoped, tag = 'input window, operand 0']
    #allocation4 [shape = 's32[2]{0}', space=sflag, size = 0x8, scoped, tag = 'scoped memory for tpu_custom_call.1']
    #allocation5 [shape = 's32[2]{0}', space=sflag, size = 0x8, scoped, tag = 'scoped memory for tpu_custom_call.1']
    #allocation6 [shape = 'u8[16384]{0}', space=vmem, size = 0x4000, scoped, tag = 'output window, operand 0']
    %13 = vsyncpa [#allocation4], 0
    %s14 = scalar_lea.sflag [#allocation4], 1
    %15 = vsyncpa %s14, 0
    %16 = vsyncpa [#allocation5], 0
    %s17 = scalar_lea.sflag [#allocation5], 1
    %18 = vsyncpa %s17, 0
    loop: start=0, step=1, limit=4
    $region2: #{tpu_custom_call.1} parent=1 // loop_pre_header
      _
    $region3: #{tpu_custom_call.1} parent=1 // loop_header
      %s20 = sphi 0, %s24
      %p21 = scmp.ge.s32.totalorder %s20, 4
      %s30 = sphi 0, %s32
      %s33 = sphi 0, %s30
      %s34 = sphi 0, %s33
      %s50 = sphi 0, %s34
      %s54 = sphi 0, %s54
      %s56 = sphi 0, %s54
      %s57 = sphi 0, %s56
      %s71 = sphi 0, %s57
      %s75 = sphi 0, %s75
      %s77 = sphi 0, %s75
      %s78 = sphi 0, %s77
      %s92 = sphi 0, %s78
      %s96 = sphi 0, %s96
      %s98 = sphi 0, %s96
      %s99 = sphi 0, %s98
      %s113 = sphi 0, %s99
      %s117 = sphi 0, %s117
      %s119 = sphi 0, %s117
      %s120 = sphi 0, %s119
      %s134 = sphi 0, %s120
      %s138 = sphi 0, %s138
      %s140 = sphi 0, %s138
      %s141 = sphi 0, %s140
      %s155 = sphi 0, %s141
      %s159 = sphi 0, %s159
      %s161 = sphi 0, %s159
      %s162 = sphi 0, %s161
      %s176 = sphi 0, %s162
      %s180 = sphi 0, %s180
      %s182 = sphi 0, %s180
      %s183 = sphi 0, %s182
      %s197 = sphi 0, %s183
      %s203 = sphi 0, %s205
      %s206 = sphi 0, %s203
      %s207 = sphi 0, %s206
      %s223 = sphi 0, %s207
    $region4: #{tpu_custom_call.1} parent=1 // loop_header_branch
      %23 = sbr.rel (%p21) target = $region8
    $region5: #{tpu_custom_call.1} parent=1 // loop_body
      %s25 = ssub.s32 %s20, 1
      %s26 = ssub.s32 %s20, 2
      %s27 = sadd.s32 %s20, 1
      %s28 = ssub.s32 %s20, %s27
      %p29 = scmp.eq.s32.totalorder %s28, 0
      %s31 = sadd.s32 %s30, 1
      %s32 = scalar_select %p29, %s30, %s31
      %p35 = pneg %p29
      %p36 = scmp.eq.s32.totalorder %s20, 1
      %p37 = por %p35, %p36
      %p38 = scmp.ne.s32.totalorder %s30, %s33
      %p39 = scmp.eq.s32.totalorder %s20, 0
      %p40 = por %p38, %p39
      %p41 = scmp.ne.s32.totalorder %s30, %s33
      %p42 = scmp.eq.s32.totalorder %s25, 1
      %p43 = por %p41, %p42
      %p44 = scmp.ne.s32.totalorder %s33, %s34
      %p45 = scmp.eq.s32.totalorder %s25, 0
      %p46 = por %p44, %p45
      %p47 = scmp.ne.s32.totalorder %s33, %s34
      %p48 = scmp.eq.s32.totalorder %s26, 1
      %p49 = por %p47, %p48
      %p51 = scmp.ne.s32.totalorder %s34, %s50
      %p52 = scmp.eq.s32.totalorder %s26, 0
      %p53 = por %p51, %p52
      %s55 = sadd.s32 %s54, 1
      %p58 = scmp.eq.s32.totalorder %s20, 1
      %p59 = scmp.ne.s32.totalorder %s54, %s56
      %p60 = scmp.eq.s32.totalorder %s20, 0
      %p61 = por %p59, %p60
      %p62 = scmp.ne.s32.totalorder %s54, %s56
      %p63 = scmp.eq.s32.totalorder %s25, 1
      %p64 = por %p62, %p63
      %p65 = scmp.ne.s32.totalorder %s56, %s57
      %p66 = scmp.eq.s32.totalorder %s25, 0
      %p67 = por %p65, %p66
      %p68 = scmp.ne.s32.totalorder %s56, %s57
      %p69 = scmp.eq.s32.totalorder %s26, 1
      %p70 = por %p68, %p69
      %p72 = scmp.ne.s32.totalorder %s57, %s71
      %p73 = scmp.eq.s32.totalorder %s26, 0
      %p74 = por %p72, %p73
      %s76 = sadd.s32 %s75, 1
      %p79 = scmp.eq.s32.totalorder %s20, 1
      %p80 = scmp.ne.s32.totalorder %s75, %s77
      %p81 = scmp.eq.s32.totalorder %s20, 0
      %p82 = por %p80, %p81
      %p83 = scmp.ne.s32.totalorder %s75, %s77
      %p84 = scmp.eq.s32.totalorder %s25, 1
      %p85 = por %p83, %p84
      %p86 = scmp.ne.s32.totalorder %s77, %s78
      %p87 = scmp.eq.s32.totalorder %s25, 0
      %p88 = por %p86, %p87
      %p89 = scmp.ne.s32.totalorder %s77, %s78
      %p90 = scmp.eq.s32.totalorder %s26, 1
      %p91 = por %p89, %p90
      %p93 = scmp.ne.s32.totalorder %s78, %s92
      %p94 = scmp.eq.s32.totalorder %s26, 0
      %p95 = por %p93, %p94
      %s97 = sadd.s32 %s96, 1
      %p100 = scmp.eq.s32.totalorder %s20, 1
      %p101 = scmp.ne.s32.totalorder %s96, %s98
      %p102 = scmp.eq.s32.totalorder %s20, 0
      %p103 = por %p101, %p102
      %p104 = scmp.ne.s32.totalorder %s96, %s98
      %p105 = scmp.eq.s32.totalorder %s25, 1
      %p106 = por %p104, %p105
      %p107 = scmp.ne.s32.totalorder %s98, %s99
      %p108 = scmp.eq.s32.totalorder %s25, 0
      %p109 = por %p107, %p108
      %p110 = scmp.ne.s32.totalorder %s98, %s99
      %p111 = scmp.eq.s32.totalorder %s26, 1
      %p112 = por %p110, %p111
      %p114 = scmp.ne.s32.totalorder %s99, %s113
      %p115 = scmp.eq.s32.totalorder %s26, 0
      %p116 = por %p114, %p115
      %s118 = sadd.s32 %s117, 1
      %p121 = scmp.eq.s32.totalorder %s20, 1
      %p122 = scmp.ne.s32.totalorder %s117, %s119
      %p123 = scmp.eq.s32.totalorder %s20, 0
      %p124 = por %p122, %p123
      %p125 = scmp.ne.s32.totalorder %s117, %s119
      %p126 = scmp.eq.s32.totalorder %s25, 1
      %p127 = por %p125, %p126
      %p128 = scmp.ne.s32.totalorder %s119, %s120
      %p129 = scmp.eq.s32.totalorder %s25, 0
      %p130 = por %p128, %p129
      %p131 = scmp.ne.s32.totalorder %s119, %s120
      %p132 = scmp.eq.s32.totalorder %s26, 1
      %p133 = por %p131, %p132
      %p135 = scmp.ne.s32.totalorder %s120, %s134
      %p136 = scmp.eq.s32.totalorder %s26, 0
      %p137 = por %p135, %p136
      %s139 = sadd.s32 %s138, 1
      %p142 = scmp.eq.s32.totalorder %s20, 1
      %p143 = scmp.ne.s32.totalorder %s138, %s140
      %p144 = scmp.eq.s32.totalorder %s20, 0
      %p145 = por %p143, %p144
      %p146 = scmp.ne.s32.totalorder %s138, %s140
      %p147 = scmp.eq.s32.totalorder %s25, 1
      %p148 = por %p146, %p147
      %p149 = scmp.ne.s32.totalorder %s140, %s141
      %p150 = scmp.eq.s32.totalorder %s25, 0
      %p151 = por %p149, %p150
      %p152 = scmp.ne.s32.totalorder %s140, %s141
      %p153 = scmp.eq.s32.totalorder %s26, 1
      %p154 = por %p152, %p153
      %p156 = scmp.ne.s32.totalorder %s141, %s155
      %p157 = scmp.eq.s32.totalorder %s26, 0
      %p158 = por %p156, %p157
      %s160 = sadd.s32 %s159, 1
      %p163 = scmp.eq.s32.totalorder %s20, 1
      %p164 = scmp.ne.s32.totalorder %s159, %s161
      %p165 = scmp.eq.s32.totalorder %s20, 0
      %p166 = por %p164, %p165
      %p167 = scmp.ne.s32.totalorder %s159, %s161
      %p168 = scmp.eq.s32.totalorder %s25, 1
      %p169 = por %p167, %p168
      %p170 = scmp.ne.s32.totalorder %s161, %s162
      %p171 = scmp.eq.s32.totalorder %s25, 0
      %p172 = por %p170, %p171
      %p173 = scmp.ne.s32.totalorder %s161, %s162
      %p174 = scmp.eq.s32.totalorder %s26, 1
      %p175 = por %p173, %p174
      %p177 = scmp.ne.s32.totalorder %s162, %s176
      %p178 = scmp.eq.s32.totalorder %s26, 0
      %p179 = por %p177, %p178
      %s181 = sadd.s32 %s180, 1
      %p184 = scmp.eq.s32.totalorder %s20, 1
      %p185 = scmp.ne.s32.totalorder %s180, %s182
      %p186 = scmp.eq.s32.totalorder %s20, 0
      %p187 = por %p185, %p186
      %p188 = scmp.ne.s32.totalorder %s180, %s182
      %p189 = scmp.eq.s32.totalorder %s25, 1
      %p190 = por %p188, %p189
      %p191 = scmp.ne.s32.totalorder %s182, %s183
      %p192 = scmp.eq.s32.totalorder %s25, 0
      %p193 = por %p191, %p192
      %p194 = scmp.ne.s32.totalorder %s182, %s183
      %p195 = scmp.eq.s32.totalorder %s26, 1
      %p196 = por %p194, %p195
      %p198 = scmp.ne.s32.totalorder %s183, %s197
      %p199 = scmp.eq.s32.totalorder %s26, 0
      %p200 = por %p198, %p199
      %s201 = ssub.s32 %s20, %s27
      %p202 = scmp.eq.s32.totalorder %s201, 0
      %s204 = sadd.s32 %s203, 1
      %s205 = scalar_select %p202, %s203, %s204
      %p208 = pneg %p202
      %p209 = scmp.eq.s32.totalorder %s20, 1
      %p210 = por %p208, %p209
      %p211 = scmp.ne.s32.totalorder %s203, %s206
      %p212 = scmp.eq.s32.totalorder %s20, 0
      %p213 = por %p211, %p212
      %p214 = scmp.ne.s32.totalorder %s203, %s206
      %p215 = scmp.eq.s32.totalorder %s25, 1
      %p216 = por %p214, %p215
      %p217 = scmp.ne.s32.totalorder %s206, %s207
      %p218 = scmp.eq.s32.totalorder %s25, 0
      %p219 = por %p217, %p218
      %p220 = scmp.ne.s32.totalorder %s206, %s207
      %p221 = scmp.eq.s32.totalorder %s26, 1
      %p222 = por %p220, %p221
      %p224 = scmp.ne.s32.totalorder %s207, %s223
      %p225 = scmp.eq.s32.totalorder %s26, 0
      %p226 = por %p224, %p225
      %p227 = scmp.le.s32.totalorder 1, %s20
      %p228 = scmp.lt.s32.totalorder %s20, 3
      %p229 = pnand %p227, %p228
      %p230 = pneg %p229
      // Predicated region
      $region9: #{tpu_custom_call.1} parent=5 // pred_check
        _
      $region10: #{tpu_custom_call.1} parent=5 // pred_check_branch
        %232 = sbr.rel (%p229) target = $region12
      $region11: #{tpu_custom_call.1} parent=5 // pred_region
        %s233 = ssub.s32 %s20, 1
        // Predicated region
        $region13: #{tpu_custom_call.1} parent=11 // pred_check
          %p234 = pneg %p67
        $region14: #{tpu_custom_call.1} parent=11 // pred_check_branch
          %236 = sbr.rel (%p234) target = $region16
        $region15: #{tpu_custom_call.1} parent=11 // pred_region
          _
        $region16: #{tpu_custom_call.1} parent=11 // pred_fallthru
          _
        // Predicated region
        $region17: #{tpu_custom_call.1} parent=11 // pred_check
          %p237 = pneg %p88
        $region18: #{tpu_custom_call.1} parent=11 // pred_check_branch
          %239 = sbr.rel (%p237) target = $region20
        $region19: #{tpu_custom_call.1} parent=11 // pred_region
          _
        $region20: #{tpu_custom_call.1} parent=11 // pred_fallthru
          _
        // Predicated region
        $region21: #{tpu_custom_call.1} parent=11 // pred_check
          %p240 = pneg %p109
        $region22: #{tpu_custom_call.1} parent=11 // pred_check_branch
          %242 = sbr.rel (%p240) target = $region24
        $region23: #{tpu_custom_call.1} parent=11 // pred_region
          _
        $region24: #{tpu_custom_call.1} parent=11 // pred_fallthru
          _
        // Predicated region
        $region25: #{tpu_custom_call.1} parent=11 // pred_check
          %p243 = pneg %p130
        $region26: #{tpu_custom_call.1} parent=11 // pred_check_branch
          %245 = sbr.rel (%p243) target = $region28
        $region27: #{tpu_custom_call.1} parent=11 // pred_region
          _
        $region28: #{tpu_custom_call.1} parent=11 // pred_fallthru
          _
        // Predicated region
        $region29: #{tpu_custom_call.1} parent=11 // pred_check
          %p246 = pneg %p151
        $region30: #{tpu_custom_call.1} parent=11 // pred_check_branch
          %248 = sbr.rel (%p246) target = $region32
        $region31: #{tpu_custom_call.1} parent=11 // pred_region
          _
        $region32: #{tpu_custom_call.1} parent=11 // pred_fallthru
          _
        // Predicated region
        $region33: #{tpu_custom_call.1} parent=11 // pred_check
          %p249 = pneg %p172
        $region34: #{tpu_custom_call.1} parent=11 // pred_check_branch
          %251 = sbr.rel (%p249) target = $region36
        $region35: #{tpu_custom_call.1} parent=11 // pred_region
          _
        $region36: #{tpu_custom_call.1} parent=11 // pred_fallthru
          _
        // Predicated region
        $region37: #{tpu_custom_call.1} parent=11 // pred_check
          %p252 = pneg %p193
        $region38: #{tpu_custom_call.1} parent=11 // pred_check_branch
          %254 = sbr.rel (%p252) target = $region40
        $region39: #{tpu_custom_call.1} parent=11 // pred_region
          _
        $region40: #{tpu_custom_call.1} parent=11 // pred_fallthru
          _
      $region12: #{tpu_custom_call.1} parent=5 // pred_fallthru
        _
      %p255 = scmp.lt.s32.totalorder %s20, 2
      // Predicated region
      $region41: #{tpu_custom_call.1} parent=5 // pred_check
        %p256 = pneg %p255
      $region42: #{tpu_custom_call.1} parent=5 // pred_check_branch
        %258 = sbr.rel (%p256) target = $region44
      $region43: #{tpu_custom_call.1} parent=5 // pred_region
        // Predicated region
        $region45: #{tpu_custom_call.1} parent=43 // pred_check
          %p259 = pneg %p40
        $region46: #{tpu_custom_call.1} parent=43 // pred_check_branch
          %261 = sbr.rel (%p259) target = $region48
        $region47: #{tpu_custom_call.1} parent=43 // pred_region
          %s262 = sand.u32 %s30, 1
          %s263 = scalar_lea.sflag [#allocation4], %s262
          %s264 = sand.u32 %s30, 1
          %s265 = smul.addr %s264, 16
          %s266 = scalar_lea.vmem [#allocation3], %s265
          %s268 = ssub.s32 256, 256
          %269 = vsyncadd %s263, %s268
          %s270 = smul.addr %s20, 2
          %s271 = smul.addr %s270, 128
          %s272 = scalar_lea.hbm %s0, %s271
          %s274 = sshll.u32 %s266, 4
          %s275 = int_to_ptr.vmem [resolvable:$true] %s274
          %277 = dma.hbm_to_vmem [thread:$0]  %s272, 256, %s275, %s263
        $region48: #{tpu_custom_call.1} parent=43 // pred_fallthru
          _
      $region44: #{tpu_custom_call.1} parent=5 // pred_fallthru
        _
      %p278 = scmp.le.s32.totalorder 1, %s20
      %p279 = scmp.lt.s32.totalorder %s20, 3
      %p280 = pnand %p278, %p279
      %p281 = pneg %p280
      // Predicated region
      $region49: #{tpu_custom_call.1} parent=5 // pred_check
        _
      $region50: #{tpu_custom_call.1} parent=5 // pred_check_branch
        %283 = sbr.rel (%p280) target = $region52
      $region51: #{tpu_custom_call.1} parent=5 // pred_region
        %s284 = ssub.s32 %s20, 1
        %s285 = sand.u32 %s33, 1
        %s286 = scalar_lea.sflag [#allocation4], %s285
        %s287 = sand.u32 %s33, 1
        %s288 = smul.addr %s287, 16
        %s289 = scalar_lea.vmem [#allocation3], %s288
        // Predicated region
        $region53: #{tpu_custom_call.1} parent=51 // pred_check
          %p290 = pneg %p46
        $region54: #{tpu_custom_call.1} parent=51 // pred_check_branch
          %292 = sbr.rel (%p290) target = $region56
        $region55: #{tpu_custom_call.1} parent=51 // pred_region
          %293 = dma.done %s286, 256
        $region56: #{tpu_custom_call.1} parent=51 // pred_fallthru
          _
        %s294 = sand.u32 %s33, 1
        %s295 = scalar_lea.sflag [#allocation4], %s294
        %s296 = sand.u32 %s33, 1
        %s297 = smul.addr %s296, 16
        %s298 = scalar_lea.vmem [#allocation3], %s297
        %p299 = pneg %p46
        %p300 = pneg %p43
        %p301 = pneg %p67
        %p302 = pneg %p64
        %p303 = pneg %p88
        %p304 = pneg %p85
        %p305 = pneg %p109
        %p306 = pneg %p106
        %p307 = pneg %p130
        %p308 = pneg %p127
        %p309 = pneg %p151
        %p310 = pneg %p148
        %p311 = pneg %p172
        %p312 = pneg %p169
        %p313 = pneg %p193
        %p314 = pneg %p190
        %p315 = pneg %p219
        %p316 = pneg %p216
        %s317 = sand.u32 %s206, 1
        %s318 = scalar_lea.sflag [#allocation5], %s317
        %s319 = sand.u32 %s206, 1
        %s320 = smul.addr %s319, 16
        %s321 = scalar_lea.vmem [#allocation6], %s320
        %v323 = vld [vmem:[%s289] sm:$0xff]
        %v324 = vld [vmem:[%s289 + $0x8] sm:$0xff]
        %v325 = vld [vmem:[%s1] sm:$0x3]
        %v326 = vpack.c.bf16 %v323, %v323
        %v327 = vpack.c.bf16 %v324, %v324
        %v328 = vld [vmem:[%s2] sm:$0xf]
        %330 = vset.pattern.permute.xlu0 0
        %331 = vperm.xlu0 %330, %v328
        %v332 = vpop.permute.xlu0 %331
        %vm334 = vcmask 64512
        %v336 = vsel %vm334, %v325, 0
        %vm338 = vcmask 1043456
        %v340 = vsel %vm338, %v326, 0
        %v343 = vsel %vm338, %v327, 0
        %345 = vmatprep.subr.bf16.mxu0 %v343
        %346 = vmatpush1.bf16.msra.mxu0 %v340
        %347 = vmatprep.subr.bf16.mxu0 0
        %348 = vmatpush1.bf16.msra.mxu0 0
        %349 = vmatprep.subr.bf16.mxu0 0
        %350 = vmatpush1.bf16.msra.mxu0 0
        %351 = vmatprep.subr.bf16.mxu0 0
        %352 = vmatpush1.bf16.msra.mxu0 0
        %353 = vmatprep.subr.bf16.mxu0 0
        %354 = vmatpush1.bf16.msra.mxu0 0
        %355 = vmatprep.subr.bf16.mxu0 0
        %356 = vmatpush1.bf16.msra.mxu0 0
        %357 = vmatprep.subr.bf16.mxu0 0
        %358 = vmatpush1.bf16.msra.mxu0 0
        %359 = vmatprep.subr.bf16.mxu0 0
        %360 = vmatpush1.bf16.msra.mxu0 0
        %361 = vmatprep.subr.bf16.mxu0 0
        %362 = vmatpush1.bf16.msra.mxu0 0
        %363 = vmatprep.subr.bf16.mxu0 0
        %364 = vmatpush1.bf16.msra.mxu0 0
        %365 = vmatprep.subr.bf16.mxu0 0
        %366 = vmatpush1.bf16.msra.mxu0 0
        %367 = vmatprep.subr.bf16.mxu0 0
        %368 = vmatpush1.bf16.msra.mxu0 0
        %369 = vmatprep.subr.bf16.mxu0 0
        %370 = vmatpush1.bf16.msra.mxu0 0
        %371 = vmatprep.subr.bf16.mxu0 0
        %372 = vmatpush1.bf16.msra.mxu0 0
        %373 = vmatprep.subr.bf16.mxu0 0
        %374 = vmatpush1.bf16.msra.mxu0 0
        %375 = vmatprep.subr.bf16.mxu0 0
        %376 = vmatpush1.bf16.msra.mxu0 0
        %377 = vmatprep.mubr.bf16.mxu0 0
        %378 = vmatmul.mubr.bf16.gmra.mrb[0].mxu0 %v336
        %v379 = vpop.f32.mrb[0].mxu0
        %v380 = vadd.f32 %v332, %v379
        %v381 = vpop.f32.mrb[0].mxu0
        %v382 = vadd.f32 %v332, %v381
        %v383 = vpop.f32.mrb[0].mxu0
        %v384 = vpop.f32.mrb[0].mxu0
        %385 = vdwg.mxu0
        %v386 = vmax.f32 %v380, 0.0
        %v387 = vmax.f32 %v382, 0.0
        %390 = vrot.lane.b32.xlu0 %v386, 17
        %v391 = vpop.permute.xlu0 %390
        %392 = vrot.lane.b32.xlu0 %v387, 17
        %v393 = vpop.permute.xlu0 %392
        %vm394 = vcmask 138240
        %v395 = vsel %vm394, %v391, %v393
        %v398 = vsel %vm394, 0.0, %v391
        %v399 = vld [vmem:[%s7] ss:$8 sm:$0x3]
        %v401 = vlaneseq
        %v402 = vshrl.u32 %v401, 7
        %v403 = vsub.s32 0, %v402
        %v404 = vrot.slane %v399, %v403
        %v405 = vlaneseq
        %v406 = vshrl.u32 %v405, 7
        %v407 = vsub.s32 1, %v406
        %v408 = vrot.slane %v399, %v407
        %v411 = vmul.f32 %v398, %v404
        %v412 = vmul.f32 %v395, %v408
        %413 = vst [vmem:[#allocation2] sm:$0xf] %v411
        %414 = vst [vmem:[#allocation2 + $0x8] sm:$0xf] %v412
        %415 = vrot.lane.b32.xlu0 %v386, 16
        %v416 = vpop.permute.xlu0 %415
        %417 = vrot.lane.b32.xlu0 %v387, 16
        %v418 = vpop.permute.xlu0 %417
        %vm419 = vcmask 130048
        %v420 = vsel %vm419, %v416, %v418
        %v423 = vsel %vm419, 0.0, %v416
        %s424 = scalar_lea.vmem %s7, 1
        %v425 = vld [vmem:[%s424] ss:$8 sm:$0x3]
        %v427 = vlaneseq
        %v428 = vshrl.u32 %v427, 7
        %v429 = vsub.s32 0, %v428
        %v430 = vrot.slane %v425, %v429
        %v431 = vlaneseq
        %v432 = vshrl.u32 %v431, 7
        %v433 = vsub.s32 1, %v432
        %v434 = vrot.slane %v425, %v433
        %v437 = vmul.f32 %v423, %v430
        %v438 = vmul.f32 %v420, %v434
        %v441 = vrot.slane %v437, 4
        %v442 = vrot.slane %v438, 4
        %445 = vst [vmem:[#allocation2] sm:$0xf0] %v441
        %446 = vst [vmem:[#allocation2 + $0x8] sm:$0xf0] %v442
        %447 = vrot.lane.b32.xlu0 %v386, 15
        %v448 = vpop.permute.xlu0 %447
        %449 = vrot.lane.b32.xlu0 %v387, 15
        %v450 = vpop.permute.xlu0 %449
        %vm451 = vcmask 121856
        %v452 = vsel %vm451, %v448, %v450
        %v455 = vsel %vm451, 0.0, %v448
        %s456 = scalar_lea.vmem %s7, 2
        %v457 = vld [vmem:[%s456] ss:$8 sm:$0x3]
        %v459 = vlaneseq
        %v460 = vshrl.u32 %v459, 7
        %v461 = vsub.s32 0, %v460
        %v462 = vrot.slane %v457, %v461
        %v463 = vlaneseq
        %v464 = vshrl.u32 %v463, 7
        %v465 = vsub.s32 1, %v464
        %v466 = vrot.slane %v457, %v465
        %v469 = vmul.f32 %v455, %v462
        %v470 = vmul.f32 %v452, %v466
        %471 = vst [vmem:[#allocation2 + $0x10] sm:$0xf] %v469
        %472 = vst [vmem:[#allocation2 + $0x18] sm:$0xf] %v470
        %473 = vrot.lane.b32.xlu0 %v386, 1
        %v474 = vpop.permute.xlu0 %473
        %475 = vrot.lane.b32.xlu0 %v387, 1
        %v476 = vpop.permute.xlu0 %475
        %vm477 = vcmask 7168
        %v478 = vsel %vm477, %v474, %v476
        %v481 = vsel %vm477, 0.0, %v474
        %s482 = scalar_lea.vmem %s7, 3
        %v483 = vld [vmem:[%s482] ss:$8 sm:$0x3]
        %v485 = vlaneseq
        %v486 = vshrl.u32 %v485, 7
        %v487 = vsub.s32 0, %v486
        %v488 = vrot.slane %v483, %v487
        %v489 = vlaneseq
        %v490 = vshrl.u32 %v489, 7
        %v491 = vsub.s32 1, %v490
        %v492 = vrot.slane %v483, %v491
        %v495 = vmul.f32 %v481, %v488
        %v496 = vmul.f32 %v478, %v492
        %v499 = vrot.slane %v495, 4
        %v500 = vrot.slane %v496, 4
        %503 = vst [vmem:[#allocation2 + $0x10] sm:$0xf0] %v499
        %504 = vst [vmem:[#allocation2 + $0x18] sm:$0xf0] %v500
        %s505 = scalar_lea.vmem %s7, 4
        %v506 = vld [vmem:[%s505] ss:$8 sm:$0x3]
        %v508 = vlaneseq
        %v509 = vshrl.u32 %v508, 7
        %v510 = vsub.s32 0, %v509
        %v511 = vrot.slane %v506, %v510
        %v512 = vlaneseq
        %v513 = vshrl.u32 %v512, 7
        %v514 = vsub.s32 1, %v513
        %v515 = vrot.slane %v506, %v514
        %v518 = vmul.f32 %v386, %v511
        %v519 = vmul.f32 %v387, %v515
        %520 = vst [vmem:[#allocation2 + $0x20] sm:$0xf] %v518
        %521 = vst [vmem:[#allocation2 + $0x28] sm:$0xf] %v519
        %522 = vrot.lane.b32.xlu0 %v386, 127
        %v523 = vpop.permute.xlu0 %522
        %524 = vrot.lane.b32.xlu0 %v387, 127
        %v525 = vpop.permute.xlu0 %524
        %vm526 = vcmask 1039360
        %v527 = vsel %vm526, %v523, %v525
        %v530 = vsel %vm526, %v525, 0.0
        %s531 = scalar_lea.vmem %s7, 5
        %v532 = vld [vmem:[%s531] ss:$8 sm:$0x3]
        %v534 = vlaneseq
        %v535 = vshrl.u32 %v534, 7
        %v536 = vsub.s32 0, %v535
        %v537 = vrot.slane %v532, %v536
        %v538 = vlaneseq
        %v539 = vshrl.u32 %v538, 7
        %v540 = vsub.s32 1, %v539
        %v541 = vrot.slane %v532, %v540
        %v544 = vmul.f32 %v527, %v537
        %v545 = vmul.f32 %v530, %v541
        %v548 = vrot.slane %v544, 4
        %v549 = vrot.slane %v545, 4
        %552 = vst [vmem:[#allocation2 + $0x20] sm:$0xf0] %v548
        %553 = vst [vmem:[#allocation2 + $0x28] sm:$0xf0] %v549
        %554 = vrot.lane.b32.xlu0 %v386, 113
        %v555 = vpop.permute.xlu0 %554
        %556 = vrot.lane.b32.xlu0 %v387, 113
        %v557 = vpop.permute.xlu0 %556
        %vm558 = vcmask 924672
        %v559 = vsel %vm558, %v555, %v557
        %v562 = vsel %vm558, %v557, 0.0
        %s563 = scalar_lea.vmem %s7, 6
        %v564 = vld [vmem:[%s563] ss:$8 sm:$0x3]
        %v566 = vlaneseq
        %v567 = vshrl.u32 %v566, 7
        %v568 = vsub.s32 0, %v567
        %v569 = vrot.slane %v564, %v568
        %v570 = vlaneseq
        %v571 = vshrl.u32 %v570, 7
        %v572 = vsub.s32 1, %v571
        %v573 = vrot.slane %v564, %v572
        %v576 = vmul.f32 %v559, %v569
        %v577 = vmul.f32 %v562, %v573
        %578 = vst [vmem:[#allocation2 + $0x30] sm:$0xf] %v576
        %579 = vst [vmem:[#allocation2 + $0x38] sm:$0xf] %v577
        %580 = vrot.lane.b32.xlu0 %v386, 112
        %v581 = vpop.permute.xlu0 %580
        %582 = vrot.lane.b32.xlu0 %v387, 112
        %v583 = vpop.permute.xlu0 %582
        %vm584 = vcmask 916480
        %v585 = vsel %vm584, %v581, %v583
        %v588 = vsel %vm584, %v583, 0.0
        %s589 = scalar_lea.vmem %s7, 7
        %v590 = vld [vmem:[%s589] ss:$8 sm:$0x3]
        %v592 = vlaneseq
        %v593 = vshrl.u32 %v592, 7
        %v594 = vsub.s32 0, %v593
        %v595 = vrot.slane %v590, %v594
        %v596 = vlaneseq
        %v597 = vshrl.u32 %v596, 7
        %v598 = vsub.s32 1, %v597
        %v599 = vrot.slane %v590, %v598
        %v602 = vmul.f32 %v585, %v595
        %v603 = vmul.f32 %v588, %v599
        %v606 = vrot.slane %v602, 4
        %v607 = vrot.slane %v603, 4
        %610 = vst [vmem:[#allocation2 + $0x30] sm:$0xf0] %v606
        %611 = vst [vmem:[#allocation2 + $0x38] sm:$0xf0] %v607
        %612 = vrot.lane.b32.xlu0 %v386, 111
        %v613 = vpop.permute.xlu0 %612
        %614 = vrot.lane.b32.xlu0 %v387, 111
        %v615 = vpop.permute.xlu0 %614
        %vm616 = vcmask 908288
        %v617 = vsel %vm616, %v613, %v615
        %v620 = vsel %vm616, %v615, 0.0
        %s621 = scalar_lea.vmem %s7, 16
        %v622 = vld [vmem:[%s621] ss:$8 sm:$0x3]
        %v624 = vlaneseq
        %v625 = vshrl.u32 %v624, 7
        %v626 = vsub.s32 0, %v625
        %v627 = vrot.slane %v622, %v626
        %v628 = vlaneseq
        %v629 = vshrl.u32 %v628, 7
        %v630 = vsub.s32 1, %v629
        %v631 = vrot.slane %v622, %v630
        %v634 = vmul.f32 %v617, %v627
        %v635 = vmul.f32 %v620, %v631
        %636 = vst [vmem:[#allocation2 + $0x40] sm:$0xf] %v634
        %637 = vst [vmem:[#allocation2 + $0x48] sm:$0xf] %v635
        %v638 = vld [vmem:[#allocation2] sm:$0xff]
        %v639 = vld [vmem:[#allocation2 + $0x8] sm:$0xff]
        %v640 = vld [vmem:[#allocation2 + $0x10] sm:$0xff]
        %v641 = vld [vmem:[#allocation2 + $0x18] sm:$0xff]
        %v642 = vld [vmem:[#allocation2 + $0x20] sm:$0xff]
        %v643 = vld [vmem:[#allocation2 + $0x28] sm:$0xff]
        %v644 = vld [vmem:[#allocation2 + $0x30] sm:$0xff]
        %v645 = vld [vmem:[#allocation2 + $0x38] sm:$0xff]
        %v646 = vld [vmem:[#allocation2 + $0x40] sm:$0xf]
        %v647 = vld [vmem:[#allocation2 + $0x48] sm:$0xf]
        %v648 = vpack.c.bf16 %v640, %v638
        %v649 = vpack.c.bf16 %v641, %v639
        %v650 = vpack.c.bf16 %v644, %v642
        %v651 = vpack.c.bf16 %v645, %v643
        %v652 = vpack.c.bf16 %v646, %v646
        %v653 = vpack.c.bf16 %v647, %v647
        %v654 = vld [vmem:[%s3] sm:$0x3]
        %v655 = vld [vmem:[%s4] sm:$0xf]
        %657 = vset.pattern.permute.xlu0 0
        %658 = vperm.xlu0 %657, %v655
        %v659 = vpop.permute.xlu0 %658
        %vm661 = vcmask 293888
        %v663 = vsel %vm661, %v654, 0
        %vm665 = vcmask 1041408
        %v667 = vsel %vm665, %v652, 0
        %v670 = vsel %vm665, %v653, 0
        %672 = vmatprep.subr.bf16.mxu0 %v649
        %673 = vmatpush1.bf16.msra.mxu0 %v648
        %674 = vmatprep.subr.bf16.mxu0 %v651
        %675 = vmatpush1.bf16.msra.mxu0 %v650
        %676 = vmatprep.subr.bf16.mxu0 %v670
        %677 = vmatpush1.bf16.msra.mxu0 %v667
        %678 = vmatprep.subr.bf16.mxu0 0
        %679 = vmatpush1.bf16.msra.mxu0 0
        %680 = vmatprep.subr.bf16.mxu0 0
        %681 = vmatpush1.bf16.msra.mxu0 0
        %682 = vmatprep.subr.bf16.mxu0 0
        %683 = vmatpush1.bf16.msra.mxu0 0
        %684 = vmatprep.subr.bf16.mxu0 0
        %685 = vmatpush1.bf16.msra.mxu0 0
        %686 = vmatprep.subr.bf16.mxu0 0
        %687 = vmatpush1.bf16.msra.mxu0 0
        %688 = vmatprep.subr.bf16.mxu0 0
        %689 = vmatpush1.bf16.msra.mxu0 0
        %690 = vmatprep.subr.bf16.mxu0 0
        %691 = vmatpush1.bf16.msra.mxu0 0
        %692 = vmatprep.subr.bf16.mxu0 0
        %693 = vmatpush1.bf16.msra.mxu0 0
        %694 = vmatprep.subr.bf16.mxu0 0
        %695 = vmatpush1.bf16.msra.mxu0 0
        %696 = vmatprep.subr.bf16.mxu0 0
        %697 = vmatpush1.bf16.msra.mxu0 0
        %698 = vmatprep.subr.bf16.mxu0 0
        %699 = vmatpush1.bf16.msra.mxu0 0
        %700 = vmatprep.subr.bf16.mxu0 0
        %701 = vmatpush1.bf16.msra.mxu0 0
        %702 = vmatprep.subr.bf16.mxu0 0
        %703 = vmatpush1.bf16.msra.mxu0 0
        %704 = vmatprep.mubr.bf16.mxu0 0
        %705 = vmatmul.mubr.bf16.gmra.mrb[0].mxu0 %v663
        %v706 = vpop.f32.mrb[0].mxu0
        %v707 = vadd.f32 %v659, %v706
        %v708 = vpop.f32.mrb[0].mxu0
        %v709 = vadd.f32 %v659, %v708
        %v710 = vpop.f32.mrb[0].mxu0
        %v711 = vpop.f32.mrb[0].mxu0
        %712 = vdwg.mxu0
        %v713 = vmax.f32 %v707, 0.0
        %v714 = vmax.f32 %v709, 0.0
        %v715 = vld [vmem:[%s5] sm:$0xf]
        %v716 = vpack.c.bf16 %v713, %v713
        %v717 = vpack.c.bf16 %v714, %v714
        %v718 = vld [vmem:[%s6] sm:$0xff]
        %720 = vset.pattern.permute.xlu0 0
        %721 = vperm.xlu0 %720, %v718
        %v722 = vpop.permute.xlu0 %721
        %vm724 = vcmask 31744
        %v726 = vsel %vm724, %v715, 0
        %v729 = vsel %vm665, %v716, 0
        %v732 = vsel %vm665, %v717, 0
        %734 = vmatprep.subr.bf16.mxu0 %v732
        %735 = vmatpush1.bf16.msra.mxu0 %v729
        %736 = vmatprep.subr.bf16.mxu0 0
        %737 = vmatpush1.bf16.msra.mxu0 0
        %738 = vmatprep.subr.bf16.mxu0 0
        %739 = vmatpush1.bf16.msra.mxu0 0
        %740 = vmatprep.subr.bf16.mxu0 0
        %741 = vmatpush1.bf16.msra.mxu0 0
        %742 = vmatprep.subr.bf16.mxu0 0
        %743 = vmatpush1.bf16.msra.mxu0 0
        %744 = vmatprep.subr.bf16.mxu0 0
        %745 = vmatpush1.bf16.msra.mxu0 0
        %746 = vmatprep.subr.bf16.mxu0 0
        %747 = vmatpush1.bf16.msra.mxu0 0
        %748 = vmatprep.subr.bf16.mxu0 0
        %749 = vmatpush1.bf16.msra.mxu0 0
        %750 = vmatprep.subr.bf16.mxu0 0
        %751 = vmatpush1.bf16.msra.mxu0 0
        %752 = vmatprep.subr.bf16.mxu0 0
        %753 = vmatpush1.bf16.msra.mxu0 0
        %754 = vmatprep.subr.bf16.mxu0 0
        %755 = vmatpush1.bf16.msra.mxu0 0
        %756 = vmatprep.subr.bf16.mxu0 0
        %757 = vmatpush1.bf16.msra.mxu0 0
        %758 = vmatprep.subr.bf16.mxu0 0
        %759 = vmatpush1.bf16.msra.mxu0 0
        %760 = vmatprep.subr.bf16.mxu0 0
        %761 = vmatpush1.bf16.msra.mxu0 0
        %762 = vmatprep.subr.bf16.mxu0 0
        %763 = vmatpush1.bf16.msra.mxu0 0
        %764 = vmatprep.subr.bf16.mxu0 0
        %765 = vmatpush1.bf16.msra.mxu0 0
        %766 = vmatprep.mubr.bf16.mxu0 0
        %767 = vmatmul.mubr.bf16.gmra.mrb[0].mxu0 %v726
        %v768 = vpop.f32.mrb[0].mxu0
        %v769 = vadd.f32 %v722, %v768
        %v770 = vpop.f32.mrb[0].mxu0
        %v771 = vadd.f32 %v722, %v770
        %v772 = vpop.f32.mrb[0].mxu0
        %v773 = vpop.f32.mrb[0].mxu0
        %774 = vdwg.mxu0
        %v775 = vadd.f32 %v769, %v323
        %v776 = vadd.f32 %v771, %v324
        %v777 = vmax.f32 %v775, 0.0
        %v778 = vmax.f32 %v776, 0.0
        %779 = vst [vmem:[%s321] sm:$0xff] %v777
        %780 = vst [vmem:[%s321 + $0x8] sm:$0xff] %v778
        %s781 = sand.u32 %s206, 1
        %s782 = scalar_lea.sflag [#allocation5], %s781
        %s783 = sand.u32 %s206, 1
        %s784 = smul.addr %s783, 16
        %s785 = scalar_lea.vmem [#allocation6], %s784
        // Predicated region
        $region57: #{tpu_custom_call.1} parent=51 // pred_check
          %p786 = pneg %p216
        $region58: #{tpu_custom_call.1} parent=51 // pred_check_branch
          %788 = sbr.rel (%p786) target = $region60
        $region59: #{tpu_custom_call.1} parent=51 // pred_region
          %s790 = ssub.s32 256, 256
          %791 = vsyncadd %s782, %s790
          %s792 = smul.addr %s25, 2
          %s793 = smul.addr %s792, 128
          %s794 = scalar_lea.hbm %s8, %s793
          %s796 = sshll.u32 %s785, 4
          %s797 = int_to_ptr.vmem [resolvable:$true] %s796
          %799 = dma.vmem_to_hbm [thread:$0]  %s797, 256, %s794, %s782
        $region60: #{tpu_custom_call.1} parent=51 // pred_fallthru
          _
      $region52: #{tpu_custom_call.1} parent=5 // pred_fallthru
        _
      %p800 = scmp.le.s32.totalorder 2, %s20
      // Predicated region
      $region61: #{tpu_custom_call.1} parent=5 // pred_check
        %p801 = pneg %p800
      $region62: #{tpu_custom_call.1} parent=5 // pred_check_branch
        %803 = sbr.rel (%p801) target = $region64
      $region63: #{tpu_custom_call.1} parent=5 // pred_region
        %s804 = ssub.s32 %s20, 2
        // Predicated region
        $region65: #{tpu_custom_call.1} parent=63 // pred_check
          %p805 = pneg %p222
        $region66: #{tpu_custom_call.1} parent=63 // pred_check_branch
          %807 = sbr.rel (%p805) target = $region68
        $region67: #{tpu_custom_call.1} parent=63 // pred_region
          %s808 = sand.u32 %s207, 1
          %s809 = scalar_lea.sflag [#allocation5], %s808
          %s810 = sand.u32 %s207, 1
          %s811 = smul.addr %s810, 16
          %s812 = scalar_lea.vmem [#allocation6], %s811
          %813 = dma.done %s809, 256
        $region68: #{tpu_custom_call.1} parent=63 // pred_fallthru
          _
      $region64: #{tpu_custom_call.1} parent=5 // pred_fallthru
        _
    $region6: #{tpu_custom_call.1} parent=1 // loop_footer
      %s24 = sadd.s32 1, %s20
    $region7: #{tpu_custom_call.1} parent=1 // loop_footer_branch
      %19 = sbr.rel target = $region3
    $region8: #{tpu_custom_call.1} parent=1 // loop_exit
      _
    %814 = vsyncpa [#allocation4], 1
    %s815 = scalar_lea.sflag [#allocation4], 1
    %816 = vsyncpa %s815, 1
    %817 = vsyncpa [#allocation5], 1
    %s818 = scalar_lea.sflag [#allocation5], 1
    %819 = vsyncpa %s818, 1

</llo_original>
